<compile_context>
chip_gen: v5e
topology: v5e:2x2
jax: 0.10.0
libtpu: 0.0.40
codegen_flags: <defaults>
</compile_context>

<pallas_src>
import functools

import jax
import jax.numpy as jnp
from jax.experimental import pallas as pl
from jax.experimental.pallas import tpu as pltpu


def _focal_loss_kernel(inputs_ref, targets_ref, alpha_ref, out_ref, *, gamma):
    """One grid step processes a (block_n, C) tile of rows."""
    x = inputs_ref[...].astype(jnp.float32)        # [bn, C] (bf16 ok: upcast)
    tgt = targets_ref[...]                         # [bn, 1] int32
    alpha = alpha_ref[...].astype(jnp.float32)     # [1, C]

    bn, c = x.shape
    # One-hot class selection via a lane-axis iota (== torch scatter_(1, ids, 1)).
    col = jax.lax.broadcasted_iota(jnp.int32, (bn, c), 1)
    is_tgt = col == tgt                            # [bn, C] bool

    # Log-softmax gather of the target class (no full softmax divide needed).
    x_max = jnp.max(x, axis=-1, keepdims=True)                   # [bn, 1]
    denom = jnp.sum(jnp.exp(x - x_max), axis=-1, keepdims=True)  # [bn, 1]
    x_t = jnp.sum(jnp.where(is_tgt, x, 0.0), axis=-1, keepdims=True)
    alpha_t = jnp.sum(jnp.where(is_tgt, alpha, 0.0), axis=-1, keepdims=True)

    log_p = (x_t - x_max) - jnp.log(denom)         # exact log softmax(target)
    probs = jnp.exp(log_p)                         # target-class probability
    one_minus_p = 1.0 - probs

    # Focal modulation (1 - p)^gamma without pow() on the hot path.
    g = float(gamma)
    if g == 0.0:
        focal = jnp.ones_like(one_minus_p)
    elif g == int(g) and 0 < int(g) <= 4:
        focal = one_minus_p
        for _ in range(int(g) - 1):
            focal = focal * one_minus_p
    else:
        # Non-integer gamma: single EUP-backed pow on a [bn, 1] column only.
        focal = jnp.power(one_minus_p, g)

    out_ref[...] = (-alpha_t * focal * log_p).astype(out_ref.dtype)


def _choose_block_n(n_rows, n_classes, in_itemsize, requested, vmem_limit_bytes):
    """Largest multiple-of-8 row tile that fits double-buffered in scoped VMEM."""
    lanes_in = pl.cdiv(max(int(n_classes), 1), 128) * 128
    # Double-buffered: input tile + targets tile (i32) + output tile (f32),
    # all lane-padded to 128 in VMEM.
    bytes_per_row = 2 * (lanes_in * int(in_itemsize) + 128 * 4 + 128 * 4)
    budget = vmem_limit_bytes // 4                  # headroom for spills/scratch
    cap = max(8, (budget // bytes_per_row) // 8 * 8)

    bn = min(int(requested), cap)
    n_pad8 = pl.cdiv(int(n_rows), 8) * 8
    bn = min(bn, n_pad8)
    if n_pad8 >= 16:
        # Keep >= 2 grid steps so the 'parallel' axis shards across v7x's 2 TCs.
        bn = min(bn, max(8, (pl.cdiv(n_pad8, 2) // 8) * 8))
    bn = max(8, bn - (bn % 8))
    return bn


def softmax_focal_loss(inputs, targets, alpha, *, gamma=2.0, reduction="none",
                       block_n=None, vmem_limit_bytes=32 * 1024 * 1024):
    """Pallas implementation of Softmax_FocalLoss.forward.

    inputs:  [N, C] float (f32 or bf16)
    targets: [N]    int
    alpha:   [C, 1] or [C] float (per-class weights, like the torch module)
    """
    N, C = inputs.shape

    bn = _choose_block_n(N, C, jnp.dtype(inputs.dtype).itemsize,
                         1024 if block_n is None else block_n,
                         vmem_limit_bytes)
    n_blocks = pl.cdiv(N, bn)
    n_pad = n_blocks * bn

    targets2d = targets.reshape(N, 1).astype(jnp.int32)
    if n_pad != N:
        # Cheap zero padding; padded rows produce finite junk that is sliced off.
        inputs = jnp.pad(inputs, ((0, n_pad - N), (0, 0)))
        targets2d = jnp.pad(targets2d, ((0, n_pad - N), (0, 0)))
    alpha2d = alpha.reshape(1, C).astype(jnp.float32)

    kernel = functools.partial(_focal_loss_kernel, gamma=float(gamma))

    loss = pl.pallas_call(
        kernel,
        out_shape=jax.ShapeDtypeStruct((n_pad, 1), jnp.float32),
        grid_spec=pltpu.PrefetchScalarGridSpec(
            num_scalar_prefetch=0,
            grid=(n_blocks,),
            in_specs=[
                pl.BlockSpec((bn, C), lambda i: (i, 0)),   # logits tile
                pl.BlockSpec((bn, 1), lambda i: (i, 0)),   # targets tile
                pl.BlockSpec((1, C), lambda i: (0, 0)),    # alpha (shared)
            ],
            out_specs=pl.BlockSpec((bn, 1), lambda i: (i, 0)),
        ),
        compiler_params=pltpu.CompilerParams(
            dimension_semantics=("parallel",),
            vmem_limit_bytes=vmem_limit_bytes),
    )(inputs, targets2d, alpha2d)

    loss = loss[:N]
    # Reduction kept as cheap JAX glue (loss vector is ~C x smaller than inputs).
    if reduction == "mean":
        return loss.mean()
    if reduction == "sum":
        return loss.sum()
    return loss


def _reference(inputs, targets, alpha, gamma):
    x = inputs.astype(jnp.float32)
    p = jax.nn.softmax(x, axis=1)
    probs = jnp.take_along_axis(p, targets.reshape(-1, 1), axis=1)
    alpha_t = alpha.reshape(-1)[targets].reshape(-1, 1).astype(jnp.float32)
    return -alpha_t * jnp.power(1.0 - probs, gamma) * jnp.log(probs)


if __name__ == "__main__":
    num_classes = 24          # UCF24
    gamma = 2.0
    key = jax.random.PRNGKey(0)
    k_in, k_tgt, k_alpha, k_in2, k_tgt2 = jax.random.split(key, 5)

    # Non-trivial per-class alpha (module default would be ones(num_classes, 1)).
    alpha = jax.random.uniform(k_alpha, (num_classes, 1), dtype=jnp.float32,
                               minval=0.5, maxval=1.5)

    # Case 1: N divisible by the chosen tile, f32 logits.
    N = 16
    inputs = jax.random.normal(k_in, (N, num_classes), dtype=jnp.float32)
    targets = jax.random.randint(k_tgt, (N,), 0, num_classes, dtype=jnp.int32)

    loss = jax.block_until_ready(
        softmax_focal_loss(inputs, targets, alpha, gamma=gamma, reduction="none"))
    ref = _reference(inputs, targets, alpha, gamma)
    assert loss.shape == (N, 1)
    assert jnp.allclose(loss, ref, rtol=1e-5, atol=1e-5), "mismatch vs reference"

    # Case 2: awkward N exercising the cdiv-grid + zero-padding path.
    N2 = 19
    inputs2 = jax.random.normal(k_in2, (N2, num_classes), dtype=jnp.float32)
    targets2 = jax.random.randint(k_tgt2, (N2,), 0, num_classes, dtype=jnp.int32)
    loss2 = jax.block_until_ready(
        softmax_focal_loss(inputs2, targets2, alpha, gamma=gamma,
                           reduction="none"))
    ref2 = _reference(inputs2, targets2, alpha, gamma)
    assert loss2.shape == (N2, 1)
    assert jnp.allclose(loss2, ref2, rtol=1e-5, atol=1e-5), "mismatch (padded N)"

    # Case 3: bf16 logits (kernel upcasts internally).
    loss_bf16 = jax.block_until_ready(
        softmax_focal_loss(inputs.astype(jnp.bfloat16), targets, alpha,
                           gamma=gamma, reduction="none"))
    ref_bf16 = _reference(inputs.astype(jnp.bfloat16), targets, alpha, gamma)
    assert jnp.allclose(loss_bf16, ref_bf16, rtol=1e-4, atol=1e-4), "bf16 mismatch"

    # Case 4: 'mean' reduction path (handled by JAX glue, like the module).
    loss_mean = jax.block_until_ready(
        softmax_focal_loss(inputs, targets, alpha, gamma=gamma, reduction="mean"))
    assert jnp.allclose(loss_mean, ref.mean(), rtol=1e-5, atol=1e-5), "mean mismatch"

    print("KERNEL_OK")
</pallas_src>

<mosaic_0001>
module attributes {stable_mosaic.version = 11 : i64} {
  func.func @_focal_loss_kernel(%arg0: i32, %arg1: memref<8x24xf32, #tpu.memory_space<vmem>>, %arg2: memref<8x1xi32, #tpu.memory_space<vmem>>, %arg3: memref<1x24xf32, #tpu.memory_space<vmem>>, %arg4: memref<8x1xf32, #tpu.memory_space<vmem>>) attributes {dimension_semantics = [#tpu.dimension_semantics<parallel>], iteration_bounds = array<i64: 2>, scalar_prefetch = 0 : i64, scratch_operands = 0 : i64, tpu.core_type = #tpu.core_type<tc>, window_params = [{transform_indices = @transform_0, window_bounds = array<i64: 8, 24>}, {transform_indices = @transform_1, window_bounds = array<i64: 8, 1>}, {pipeline_mode = #tpu.pipeline_mode<synchronous>, transform_indices = @transform_2, window_bounds = array<i64: 1, 24>}, {transform_indices = @transform_3, window_bounds = array<i64: 8, 1>}]} {
    %c0 = arith.constant 0 : index
    %c0_0 = arith.constant 0 : index
    %0 = vector.load %arg1[%c0, %c0_0] : memref<8x24xf32, #tpu.memory_space<vmem>>, vector<8x24xf32>
    %c0_1 = arith.constant 0 : index
    %c0_2 = arith.constant 0 : index
    %1 = vector.load %arg2[%c0_1, %c0_2] : memref<8x1xi32, #tpu.memory_space<vmem>>, vector<8x1xi32>
    %c0_3 = arith.constant 0 : index
    %c0_4 = arith.constant 0 : index
    %2 = vector.load %arg3[%c0_3, %c0_4] : memref<1x24xf32, #tpu.memory_space<vmem>>, vector<1x24xf32>
    %3 = tpu.iota {dimensions = array<i32: 1>} : vector<8x24xi32>
    %4 = vector.broadcast %1 : vector<8x1xi32> to vector<8x24xi32>
    %5 = arith.cmpi eq, %3, %4 : vector<8x24xi32>
    %cst = arith.constant dense<0xFF800000> : vector<8xf32>
    %6 = vector.multi_reduction <maximumf>, %0, %cst [1] : vector<8x24xf32> to vector<8xf32>
    %7 = vector.shape_cast %6 : vector<8xf32> to vector<8x1xf32>
    %8 = vector.broadcast %7 : vector<8x1xf32> to vector<8x24xf32>
    %9 = arith.subf %0, %8 : vector<8x24xf32>
    %10 = math.exp %9 : vector<8x24xf32>
    %cst_5 = arith.constant dense<0.000000e+00> : vector<8xf32>
    %11 = vector.multi_reduction <add>, %10, %cst_5 [1] : vector<8x24xf32> to vector<8xf32>
    %12 = vector.shape_cast %11 : vector<8xf32> to vector<8x1xf32>
    %cst_6 = arith.constant 0.000000e+00 : f32
    %13 = vector.broadcast %cst_6 : f32 to vector<8x24xf32>
    %14 = arith.select %5, %0, %13 : vector<8x24xi1>, vector<8x24xf32>
    %cst_7 = arith.constant dense<0.000000e+00> : vector<8xf32>
    %15 = vector.multi_reduction <add>, %14, %cst_7 [1] : vector<8x24xf32> to vector<8xf32>
    %16 = vector.shape_cast %15 : vector<8xf32> to vector<8x1xf32>
    %cst_8 = arith.constant 0.000000e+00 : f32
    %17 = vector.shape_cast %2 : vector<1x24xf32> to vector<1x24xf32>
    %18 = vector.broadcast %17 : vector<1x24xf32> to vector<8x24xf32>
    %19 = vector.broadcast %cst_8 : f32 to vector<8x24xf32>
    %20 = arith.select %5, %18, %19 : vector<8x24xi1>, vector<8x24xf32>
    %cst_9 = arith.constant dense<0.000000e+00> : vector<8xf32>
    %21 = vector.multi_reduction <add>, %20, %cst_9 [1] : vector<8x24xf32> to vector<8xf32>
    %22 = vector.shape_cast %21 : vector<8xf32> to vector<8x1xf32>
    %23 = arith.subf %16, %7 : vector<8x1xf32>
    %24 = math.log %12 : vector<8x1xf32>
    %25 = arith.subf %23, %24 : vector<8x1xf32>
    %26 = math.exp %25 : vector<8x1xf32>
    %cst_10 = arith.constant 1.000000e+00 : f32
    %27 = vector.broadcast %cst_10 : f32 to vector<8x1xf32>
    %28 = arith.subf %27, %26 : vector<8x1xf32>
    %29 = arith.mulf %28, %28 : vector<8x1xf32>
    %cst_11 = arith.constant 0.000000e+00 : f32
    %30 = vector.broadcast %cst_11 : f32 to vector<8x1xf32>
    %31 = arith.subf %30, %22 : vector<8x1xf32>
    %32 = arith.mulf %31, %29 : vector<8x1xf32>
    %33 = arith.mulf %32, %25 : vector<8x1xf32>
    %c0_12 = arith.constant 0 : index
    %c0_13 = arith.constant 0 : index
    %34 = vector.load %arg4[%c0_12, %c0_13] : memref<8x1xf32, #tpu.memory_space<vmem>>, vector<8x1xf32>
    tpu.vector_store %arg4[%c0_12, %c0_13], %33 {strides = array<i32>} : memref<8x1xf32, #tpu.memory_space<vmem>>, vector<8x1xf32>,
    return
  }
  func.func @transform_0(%arg0: i32) -> (i32, i32) {
    %c0_i32 = arith.constant 0 : i32
    %c0_i32_0 = arith.constant 0 : i32
    return %arg0, %c0_i32 : i32, i32
  }
  func.func @transform_1(%arg0: i32) -> (i32, i32) {
    %c0_i32 = arith.constant 0 : i32
    %c0_i32_0 = arith.constant 0 : i32
    return %arg0, %c0_i32 : i32, i32
  }
  func.func @transform_2(%arg0: i32) -> (i32, i32) {
    %c0_i32 = arith.constant 0 : i32
    %c0_i32_0 = arith.constant 0 : i32
    %c0_i32_1 = arith.constant 0 : i32
    return %c0_i32, %c0_i32_0 : i32, i32
  }
  func.func @transform_3(%arg0: i32) -> (i32, i32) {
    %c0_i32 = arith.constant 0 : i32
    %c0_i32_0 = arith.constant 0 : i32
    return %arg0, %c0_i32 : i32, i32
  }
}

</mosaic_0001>

<llo_original>
// kernel: tpu_custom_call.1
$region0: #{tpu_custom_call.1}
  #allocation0 [shape = 'u32[]', space=smem, size = 0x4, offset = 0x4, fixed_abs, tag = 'smem constant byte address 0x4 - core index']
  #allocation1 [shape = 'u32[72,128]{1,0:T(1,128)}', space=vmem, size = 0x9000, scoped, tag = 'internal scratch']
  %s0 = inlined_call_operand.vmem [shape: f32[16,24], index: 0, kind: input, shape index: {}]
  %s1 = inlined_call_operand.vmem [shape: s32[16,1], index: 1, kind: input, shape index: {}]
  %s2 = inlined_call_operand.vmem [shape: f32[1,24], index: 2, kind: input, shape index: {}]
  %s3 = inlined_call_operand.vmem [shape: f32[16,1], index: 3, kind: output, shape index: {}]
  %s4 = sld [smem:[#allocation0]]
  $region45: #{tpu_custom_call.1} parent=0
    _
  %s6 = ssub.s32 1, %s4
  %s7 = scalar_select 0, %s6, %s4
  loop: start=0, step=1, limit=4
  $region2: #{tpu_custom_call.1} parent=0 // loop_pre_header
    _
  $region3: #{tpu_custom_call.1} parent=0 // loop_header
    %s9 = sphi 0, %s13
    %p10 = scmp.ge.s32.totalorder %s9, 4
    %s19 = sphi 0, %s21
    %s22 = sphi 0, %s19
    %s23 = sphi 0, %s22
    %s39 = sphi 0, %s23
    %s45 = sphi 0, %s47
    %s48 = sphi 0, %s45
    %s49 = sphi 0, %s48
    %s65 = sphi 0, %s49
    %s69 = sphi 0, %s69
    %s71 = sphi 0, %s69
    %s72 = sphi 0, %s71
    %s86 = sphi 0, %s72
    %s92 = sphi 0, %s94
    %s95 = sphi 0, %s92
    %s96 = sphi 0, %s95
    %s112 = sphi 0, %s96
  $region4: #{tpu_custom_call.1} parent=0 // loop_header_branch
    %12 = sbr.rel (%p10) target = $region8
  $region5: #{tpu_custom_call.1} parent=0 // loop_body
    %s14 = ssub.s32 %s9, 1
    %s15 = ssub.s32 %s9, 2
    %s16 = sadd.s32 %s9, 1
    %s17 = ssub.s32 %s9, %s16
    %p18 = scmp.eq.s32.totalorder %s17, 0
    %s20 = sadd.s32 %s19, 1
    %s21 = scalar_select %p18, %s19, %s20
    %p24 = pneg %p18
    %p25 = scmp.eq.s32.totalorder %s9, 1
    %p26 = por %p24, %p25
    %p27 = scmp.ne.s32.totalorder %s19, %s22
    %p28 = scmp.eq.s32.totalorder %s9, 0
    %p29 = por %p27, %p28
    %p30 = scmp.ne.s32.totalorder %s19, %s22
    %p31 = scmp.eq.s32.totalorder %s14, 1
    %p32 = por %p30, %p31
    %p33 = scmp.ne.s32.totalorder %s22, %s23
    %p34 = scmp.eq.s32.totalorder %s14, 0
    %p35 = por %p33, %p34
    %p36 = scmp.ne.s32.totalorder %s22, %s23
    %p37 = scmp.eq.s32.totalorder %s15, 1
    %p38 = por %p36, %p37
    %p40 = scmp.ne.s32.totalorder %s23, %s39
    %p41 = scmp.eq.s32.totalorder %s15, 0
    %p42 = por %p40, %p41
    %s43 = ssub.s32 %s9, %s16
    %p44 = scmp.eq.s32.totalorder %s43, 0
    %s46 = sadd.s32 %s45, 1
    %s47 = scalar_select %p44, %s45, %s46
    %p50 = pneg %p44
    %p51 = scmp.eq.s32.totalorder %s9, 1
    %p52 = por %p50, %p51
    %p53 = scmp.ne.s32.totalorder %s45, %s48
    %p54 = scmp.eq.s32.totalorder %s9, 0
    %p55 = por %p53, %p54
    %p56 = scmp.ne.s32.totalorder %s45, %s48
    %p57 = scmp.eq.s32.totalorder %s14, 1
    %p58 = por %p56, %p57
    %p59 = scmp.ne.s32.totalorder %s48, %s49
    %p60 = scmp.eq.s32.totalorder %s14, 0
    %p61 = por %p59, %p60
    %p62 = scmp.ne.s32.totalorder %s48, %s49
    %p63 = scmp.eq.s32.totalorder %s15, 1
    %p64 = por %p62, %p63
    %p66 = scmp.ne.s32.totalorder %s49, %s65
    %p67 = scmp.eq.s32.totalorder %s15, 0
    %p68 = por %p66, %p67
    %s70 = sadd.s32 %s69, 1
    %p73 = scmp.eq.s32.totalorder %s9, 1
    %p74 = scmp.ne.s32.totalorder %s69, %s71
    %p75 = scmp.eq.s32.totalorder %s9, 0
    %p76 = por %p74, %p75
    %p77 = scmp.ne.s32.totalorder %s69, %s71
    %p78 = scmp.eq.s32.totalorder %s14, 1
    %p79 = por %p77, %p78
    %p80 = scmp.ne.s32.totalorder %s71, %s72
    %p81 = scmp.eq.s32.totalorder %s14, 0
    %p82 = por %p80, %p81
    %p83 = scmp.ne.s32.totalorder %s71, %s72
    %p84 = scmp.eq.s32.totalorder %s15, 1
    %p85 = por %p83, %p84
    %p87 = scmp.ne.s32.totalorder %s72, %s86
    %p88 = scmp.eq.s32.totalorder %s15, 0
    %p89 = por %p87, %p88
    %s90 = ssub.s32 %s9, %s16
    %p91 = scmp.eq.s32.totalorder %s90, 0
    %s93 = sadd.s32 %s92, 1
    %s94 = scalar_select %p91, %s92, %s93
    %p97 = pneg %p91
    %p98 = scmp.eq.s32.totalorder %s9, 1
    %p99 = por %p97, %p98
    %p100 = scmp.ne.s32.totalorder %s92, %s95
    %p101 = scmp.eq.s32.totalorder %s9, 0
    %p102 = por %p100, %p101
    %p103 = scmp.ne.s32.totalorder %s92, %s95
    %p104 = scmp.eq.s32.totalorder %s14, 1
    %p105 = por %p103, %p104
    %p106 = scmp.ne.s32.totalorder %s95, %s96
    %p107 = scmp.eq.s32.totalorder %s14, 0
    %p108 = por %p106, %p107
    %p109 = scmp.ne.s32.totalorder %s95, %s96
    %p110 = scmp.eq.s32.totalorder %s15, 1
    %p111 = por %p109, %p110
    %p113 = scmp.ne.s32.totalorder %s96, %s112
    %p114 = scmp.eq.s32.totalorder %s15, 0
    %p115 = por %p113, %p114
    %p116 = scmp.le.s32.totalorder 1, %s9
    %p117 = scmp.lt.s32.totalorder %s9, 3
    %p118 = pnand %p116, %p117
    %p119 = pneg %p118
    // Predicated region
    $region9: #{tpu_custom_call.1} parent=5 // pred_check
      _
    $region10: #{tpu_custom_call.1} parent=5 // pred_check_branch
      %121 = sbr.rel (%p118) target = $region12
    $region11: #{tpu_custom_call.1} parent=5 // pred_region
      %s122 = ssub.s32 %s9, 1
      // Predicated region
      $region13: #{tpu_custom_call.1} parent=11 // pred_check
        %p123 = pneg %p82
      $region14: #{tpu_custom_call.1} parent=11 // pred_check_branch
        %125 = sbr.rel (%p123) target = $region16
      $region15: #{tpu_custom_call.1} parent=11 // pred_region
        _
      $region16: #{tpu_custom_call.1} parent=11 // pred_fallthru
        _
    $region12: #{tpu_custom_call.1} parent=5 // pred_fallthru
      _
    %p126 = scmp.lt.s32.totalorder %s9, 2
    // Predicated region
    $region17: #{tpu_custom_call.1} parent=5 // pred_check
      %p127 = pneg %p126
    $region18: #{tpu_custom_call.1} parent=5 // pred_check_branch
      %129 = sbr.rel (%p127) target = $region20
    $region19: #{tpu_custom_call.1} parent=5 // pred_region
      // Predicated region
      $region21: #{tpu_custom_call.1} parent=19 // pred_check
        %p130 = pneg %p29
      $region22: #{tpu_custom_call.1} parent=19 // pred_check_branch
        %132 = sbr.rel (%p130) target = $region24
      $region23: #{tpu_custom_call.1} parent=19 // pred_region
        %p133 = scmp.lt.s32.totalorder %s9, 1
        %s134 = scalar_select %p133, %s9, 1
        %s135 = smul.addr %s134, 8
        %s136 = scalar_lea.vmem %s0, %s135
      $region24: #{tpu_custom_call.1} parent=19 // pred_fallthru
        _
      // Predicated region
      $region25: #{tpu_custom_call.1} parent=19 // pred_check
        %p137 = pneg %p55
      $region26: #{tpu_custom_call.1} parent=19 // pred_check_branch
        %139 = sbr.rel (%p137) target = $region28
      $region27: #{tpu_custom_call.1} parent=19 // pred_region
        %p140 = scmp.lt.s32.totalorder %s9, 1
        %s141 = scalar_select %p140, %s9, 1
        %s142 = smul.addr %s141, 8
        %s143 = scalar_lea.vmem %s1, %s142
      $region28: #{tpu_custom_call.1} parent=19 // pred_fallthru
        _
    $region20: #{tpu_custom_call.1} parent=5 // pred_fallthru
      _
    %p144 = scmp.le.s32.totalorder 1, %s9
    %p145 = scmp.lt.s32.totalorder %s9, 3
    %p146 = pnand %p144, %p145
    %p147 = pneg %p146
    // Predicated region
    $region29: #{tpu_custom_call.1} parent=5 // pred_check
      _
    $region30: #{tpu_custom_call.1} parent=5 // pred_check_branch
      %149 = sbr.rel (%p146) target = $region32
    $region31: #{tpu_custom_call.1} parent=5 // pred_region
      %s150 = ssub.s32 %s9, 1
      %p151 = scmp.lt.s32.totalorder %s14, 1
      %s152 = scalar_select %p151, %s14, 1
      %s153 = smul.addr %s152, 8
      %s154 = scalar_lea.vmem %s0, %s153
      %p155 = pneg %p35
      %p156 = pneg %p32
      %p157 = scmp.lt.s32.totalorder %s14, 1
      %s158 = scalar_select %p157, %s14, 1
      %s159 = smul.addr %s158, 8
      %s160 = scalar_lea.vmem %s1, %s159
      %p161 = pneg %p61
      %p162 = pneg %p58
      %p163 = pneg %p82
      %p164 = pneg %p79
      %p165 = pneg %p108
      %p166 = pneg %p105
      %p167 = scmp.lt.s32.totalorder %s14, 1
      %s168 = scalar_select %p167, %s14, 1
      %s169 = smul.addr %s168, 8
      %s170 = scalar_lea.vmem %s3, %s169
      %p171 = scmp.lt.s32.totalorder %s14, 1
      %s172 = scalar_select %p171, %s14, 1
      %s173 = smul.addr %s172, 8
      %s174 = scalar_lea.vmem %s0, %s173
      %p175 = scmp.lt.s32.totalorder %s14, 1
      %s176 = scalar_select %p175, %s14, 1
      %s177 = smul.addr %s176, 8
      %s178 = scalar_lea.vmem %s1, %s177
      %p179 = scmp.lt.s32.totalorder %s14, 1
      %s180 = scalar_select %p179, %s14, 1
      %s181 = smul.addr %s180, 8
      %s182 = scalar_lea.vmem %s3, %s181
      %v183 = vld [vmem:[%s174] sm:$0xff]
      %v184 = vld [vmem:[%s178] sm:$0xff]
      %v185 = vld [vmem:[%s2] sm:$0x1]
      %v186 = vlaneseq
      %v187 = vand.u32 %v186, 127
      %188 = vset.pattern.permute.xlu0 0
      %189 = vperm.xlu0 %188, %v184
      %v190 = vpop.permute.xlu0 %189
      %vm191 = vcmp.eq.s32.totalorder %v187, %v190
      %vm192 = vcmask 195584
      %v193 = vsel %vm192, %v183, -inf
      %194 = vmax.xlane.f32.xlu0 %v193
      %v195 = vpop.xlane.xlu0 %194
      %v196 = vsub.f32 %v183, %v195
      %v197 = vmul.f32 %v196, 1.442695
      %v198 = vpow.pop %v197
      %v199 = vsel %vm192, %v198, 0.0
      %200 = vadd.xlane.f32.xlu0 %v199
      %v201 = vpop.xlane.xlu0 %200
      %v202 = vsel %vm191, %v183, 0.0
      %v203 = vsel %vm192, %v202, 0.0
      %204 = vadd.xlane.f32.xlu0 %v203
      %v205 = vpop.xlane.xlu0 %204
      %v207 = vperm.slane %v185, 0
      %v209 = vsel %vm191, %v207, 0.0
      %v210 = vsel %vm192, %v209, 0.0
      %211 = vadd.xlane.f32.xlu0 %v210
      %v212 = vpop.xlane.xlu0 %211
      %v213 = vsub.f32 %v205, %v195
      %v214 = vlog2.pop %v201
      %v215 = vmul.f32 %v214, 0.6931472
      %v216 = vsub.f32 %v213, %v215
      %v217 = vmul.f32 %v216, 1.442695
      %v218 = vpow.pop %v217
      %v219 = vsub.f32 1.0, %v218
      %v220 = vmul.f32 %v219, %v219
      %v221 = vsub.f32 0.0, %v212
      %v222 = vmul.f32 %v221, %v220
      %v223 = vmul.f32 %v222, %v216
      %vm224 = vcmask 7168
      %225 = vst.msk [vmem:[%s182] sm:$0xff] %vm224, %v223
      %p226 = scmp.lt.s32.totalorder %s14, 1
      %s227 = scalar_select %p226, %s14, 1
      %s228 = smul.addr %s227, 8
      %s229 = scalar_lea.vmem %s3, %s228
      // Predicated region
      $region33: #{tpu_custom_call.1} parent=31 // pred_check
        %p230 = pneg %p105
      $region34: #{tpu_custom_call.1} parent=31 // pred_check_branch
        %232 = sbr.rel (%p230) target = $region36
      $region35: #{tpu_custom_call.1} parent=31 // pred_region
        _
      $region36: #{tpu_custom_call.1} parent=31 // pred_fallthru
        _
    $region32: #{tpu_custom_call.1} parent=5 // pred_fallthru
      _
    %p233 = scmp.le.s32.totalorder 2, %s9
    // Predicated region
    $region37: #{tpu_custom_call.1} parent=5 // pred_check
      %p234 = pneg %p233
    $region38: #{tpu_custom_call.1} parent=5 // pred_check_branch
      %236 = sbr.rel (%p234) target = $region40
    $region39: #{tpu_custom_call.1} parent=5 // pred_region
      %s237 = ssub.s32 %s9, 2
      // Predicated region
      $region41: #{tpu_custom_call.1} parent=39 // pred_check
        %p238 = pneg %p111
      $region42: #{tpu_custom_call.1} parent=39 // pred_check_branch
        %240 = sbr.rel (%p238) target = $region44
      $region43: #{tpu_custom_call.1} parent=39 // pred_region
        %p241 = scmp.lt.s32.totalorder %s15, 1
        %s242 = scalar_select %p241, %s15, 1
        %s243 = smul.addr %s242, 8
        %s244 = scalar_lea.vmem %s3, %s243
      $region44: #{tpu_custom_call.1} parent=39 // pred_fallthru
        _
    $region40: #{tpu_custom_call.1} parent=5 // pred_fallthru
      _
  $region6: #{tpu_custom_call.1} parent=0 // loop_footer
    %s13 = sadd.s32 1, %s9
  $region7: #{tpu_custom_call.1} parent=0 // loop_footer_branch
    %8 = sbr.rel target = $region3
  $region8: #{tpu_custom_call.1} parent=0 // loop_exit
    _

</llo_original>
